<compile_context>
chip_gen: v6e
topology: v6e:2x2x1
jax: 0.10.0
libtpu: 0.0.40
codegen_flags: <defaults>
</compile_context>

<pallas_src>
import jax
import jax.numpy as jnp
from jax.experimental import pallas as pl
from jax.experimental.pallas import tpu as pltpu


def _round_up(v, m):
    return ((v + m - 1) // m) * m


def gcn_kernel(adj_ref, x_ref, w_ref, b_ref, o_ref):
    # adj_ref: (TN, Np)     row tile of the adjacency matrix
    # x_ref:   (Np, Fin_p)  node features, resident across row-tile steps
    # w_ref:   (Fin_p, Fout_p) pre-transposed weight, resident
    # b_ref:   (1, Fout_p)  bias, resident
    # o_ref:   (TN, Fout_p) output row tile
    adj = adj_ref[...]
    x = x_ref[...]
    w = w_ref[...]
    b = b_ref[...]

    # denom = sum(adj, -1, keepdim=True) + 1   (>= 1, safe to invert)
    denom = jnp.sum(adj, axis=-1, keepdims=True) + 1.0          # (TN, 1)
    inv_denom = pl.reciprocal(denom, approx=True)               # EUP, ~free

    # Ax = adj @ x  (MXU)
    ax = jnp.dot(adj, x, preferred_element_type=jnp.float32)    # (TN, Fin_p)

    # AxW = Ax @ W + b   (W already transposed in the wrapper: no in-kernel .T)
    axw = jnp.dot(ax, w, preferred_element_type=jnp.float32) + b  # (TN, Fout_p)

    # relu(AxW / denom) via reciprocal-multiply
    out = jnp.maximum(axw * inv_denom, 0.0)

    # TODO(synk): dropout is identity at inference; training-mode dropout would
    # use pltpu.prng_seed + pltpu.stateful_bernoulli.
    o_ref[...] = out.astype(o_ref.dtype)


def gcn_forward(adj, x, w, b, *, row_tile=256):
    """adj: [B, N, N], x: [B, N, Fin], w: [Fout, Fin], b: [Fout] -> [B, N, Fout]."""
    B, N, Fin = x.shape
    Fout = w.shape[0]

    # ---- TPU-friendly padded shapes --------------------------------------
    # Row (node) tile: >=8-sublane aligned; large tiles for real graph sizes.
    tn = row_tile if N >= row_tile else _round_up(N, 8)
    n_p = _round_up(N, tn)
    # Lane-dense feature dims (multiples of 128 -> unmasked vector stores).
    fin_p = _round_up(Fin, 128)
    fout_p = _round_up(Fout, 128)

    adj_p = jnp.pad(adj, ((0, 0), (0, n_p - N), (0, n_p - N)))
    x_p = jnp.pad(x, ((0, 0), (0, n_p - N), (0, fin_p - Fin)))
    # Pre-transpose weight once in the wrapper: (Fout, Fin) -> (Fin_p, Fout_p).
    w_t = jnp.pad(w.T, ((0, fin_p - Fin), (0, fout_p - Fout)))
    b_p = jnp.pad(b.reshape(1, Fout), ((0, 0), (0, fout_p - Fout)))

    num_row_tiles = n_p // tn

    # Rough VMEM estimate: double-buffered adj/out tiles + resident x/W/b.
    vmem_est = 4 * (2 * tn * n_p + n_p * fin_p + fin_p * fout_p
                    + fout_p + 2 * tn * fout_p)
    vmem_limit = int(min(max(2 * vmem_est, 32 * 1024 * 1024), 96 * 1024 * 1024))

    out_p = pl.pallas_call(
        gcn_kernel,
        out_shape=jax.ShapeDtypeStruct((B, n_p, fout_p), x.dtype),
        grid_spec=pltpu.PrefetchScalarGridSpec(
            num_scalar_prefetch=0,
            grid=(B, num_row_tiles),
            in_specs=[
                pl.BlockSpec((None, tn, n_p), lambda bi, ri: (bi, ri, 0)),    # adj row tile
                pl.BlockSpec((None, n_p, fin_p), lambda bi, ri: (bi, 0, 0)),  # x resident per batch
                pl.BlockSpec((fin_p, fout_p), lambda bi, ri: (0, 0)),         # W resident
                pl.BlockSpec((1, fout_p), lambda bi, ri: (0, 0)),             # b resident
            ],
            out_specs=pl.BlockSpec((None, tn, fout_p), lambda bi, ri: (bi, ri, 0)),
        ),
        compiler_params=pltpu.CompilerParams(
            dimension_semantics=("parallel", "parallel"),
            vmem_limit_bytes=vmem_limit,
        ),
    )(adj_p, x_p, w_t, b_p)

    return out_p[:, :N, :Fout]


def reference(adj, x, w, b):
    denom = jnp.sum(adj, axis=-1, keepdims=True) + 1.0
    ax = jnp.einsum("bnm,bmf->bnf", adj, x)
    axw = jnp.einsum("bnf,of->bno", ax, w) + b
    return jnp.maximum(axw / denom, 0.0)


if __name__ == "__main__":
    key = jax.random.PRNGKey(0)
    k_x, k_adj, k_w, k_b = jax.random.split(key, 4)

    B, N = 2, 8
    in_features, out_features = 32, 32

    x = jax.random.normal(k_x, (B, N, in_features), dtype=jnp.float32)
    # adjacency: random non-negative (soft adjacency), deterministic
    adj = jax.random.uniform(k_adj, (B, N, N), dtype=jnp.float32)

    # nn.Linear default init: U(-1/sqrt(in_features), 1/sqrt(in_features))
    bound = 1.0 / (in_features ** 0.5)
    w = jax.random.uniform(k_w, (out_features, in_features),
                           minval=-bound, maxval=bound, dtype=jnp.float32)
    b = jax.random.uniform(k_b, (out_features,),
                           minval=-bound, maxval=bound, dtype=jnp.float32)

    out = gcn_forward(adj, x, w, b)
    out = jax.block_until_ready(out)

    ref = reference(adj, x, w, b)
    assert out.shape == (B, N, out_features)
    # tolerance loosened for pl.reciprocal(approx=True) (~1e-3 relative error)
    assert jnp.allclose(out, ref, atol=1e-2, rtol=1e-2), "mismatch vs reference"

    print("KERNEL_OK")
</pallas_src>

<mosaic_0001>
module attributes {stable_mosaic.version = 11 : i64} {
  func.func @gcn_kernel(%arg0: i32, %arg1: i32, %arg2: memref<1x8x8xf32, #tpu.memory_space<vmem>>, %arg3: memref<1x8x128xf32, #tpu.memory_space<vmem>>, %arg4: memref<128x128xf32, #tpu.memory_space<vmem>>, %arg5: memref<1x128xf32, #tpu.memory_space<vmem>>, %arg6: memref<1x8x128xf32, #tpu.memory_space<vmem>>) attributes {dimension_semantics = [#tpu.dimension_semantics<parallel>, #tpu.dimension_semantics<parallel>], iteration_bounds = array<i64: 2, 1>, scalar_prefetch = 0 : i64, scratch_operands = 0 : i64, tpu.core_type = #tpu.core_type<tc>, window_params = [{transform_indices = @transform_0, window_bounds = array<i64: 1, 8, 8>}, {transform_indices = @transform_1, window_bounds = array<i64: 1, 8, 128>}, {pipeline_mode = #tpu.pipeline_mode<synchronous>, transform_indices = @transform_2, window_bounds = array<i64: 128, 128>}, {pipeline_mode = #tpu.pipeline_mode<synchronous>, transform_indices = @transform_3, window_bounds = array<i64: 1, 128>}, {transform_indices = @transform_4, window_bounds = array<i64: 1, 8, 128>}]} {
    %c0 = arith.constant 0 : index
    %c0_0 = arith.constant 0 : index
    %c0_1 = arith.constant 0 : index
    %0 = vector.load %arg2[%c0, %c0_0, %c0_1] : memref<1x8x8xf32, #tpu.memory_space<vmem>>, vector<1x8x8xf32>
    %1 = vector.shape_cast %0 : vector<1x8x8xf32> to vector<8x8xf32>
    %c0_2 = arith.constant 0 : index
    %c0_3 = arith.constant 0 : index
    %c0_4 = arith.constant 0 : index
    %2 = vector.load %arg3[%c0_2, %c0_3, %c0_4] : memref<1x8x128xf32, #tpu.memory_space<vmem>>, vector<1x8x128xf32>
    %3 = vector.shape_cast %2 : vector<1x8x128xf32> to vector<8x128xf32>
    %c0_5 = arith.constant 0 : index
    %c0_6 = arith.constant 0 : index
    %4 = vector.load %arg4[%c0_5, %c0_6] : memref<128x128xf32, #tpu.memory_space<vmem>>, vector<128x128xf32>
    %c0_7 = arith.constant 0 : index
    %c0_8 = arith.constant 0 : index
    %5 = vector.load %arg5[%c0_7, %c0_8] : memref<1x128xf32, #tpu.memory_space<vmem>>, vector<1x128xf32>
    %cst = arith.constant dense<0.000000e+00> : vector<8xf32>
    %6 = vector.multi_reduction <add>, %1, %cst [1] : vector<8x8xf32> to vector<8xf32>
    %7 = vector.shape_cast %6 : vector<8xf32> to vector<8x1xf32>
    %cst_9 = arith.constant 1.000000e+00 : f32
    %8 = vector.broadcast %cst_9 : f32 to vector<8x1xf32>
    %9 = arith.addf %7, %8 : vector<8x1xf32>
    %10 = tpu.reciprocal %9 {approx = true} : vector<8x1xf32> -> vector<8x1xf32>
    %cst_10 = arith.constant dense<0.000000e+00> : vector<8x128xf32>
    %11 = tpu.matmul %1, %3, %cst_10 {dimension_numbers = #tpu.dot_dimension_numbers<[1], [0], [0], [1], [0, 0, 1, 1], [], []>} : vector<8x8xf32>, vector<8x128xf32>, vector<8x128xf32> -> vector<8x128xf32>
    %cst_11 = arith.constant dense<0.000000e+00> : vector<8x128xf32>
    %12 = tpu.matmul %11, %4, %cst_11 {dimension_numbers = #tpu.dot_dimension_numbers<[1], [0], [0], [1], [0, 0, 1, 1], [], []>} : vector<8x128xf32>, vector<128x128xf32>, vector<8x128xf32> -> vector<8x128xf32>
    %13 = vector.broadcast %5 : vector<1x128xf32> to vector<8x128xf32>
    %14 = arith.addf %12, %13 : vector<8x128xf32>
    %15 = vector.broadcast %10 : vector<8x1xf32> to vector<8x128xf32>
    %16 = arith.mulf %14, %15 : vector<8x128xf32>
    %cst_12 = arith.constant 0.000000e+00 : f32
    %17 = vector.broadcast %cst_12 : f32 to vector<8x128xf32>
    %18 = arith.maximumf %16, %17 : vector<8x128xf32>
    %c0_13 = arith.constant 0 : index
    %c0_14 = arith.constant 0 : index
    %c0_15 = arith.constant 0 : index
    %19 = vector.load %arg6[%c0_13, %c0_14, %c0_15] : memref<1x8x128xf32, #tpu.memory_space<vmem>>, vector<1x8x128xf32>
    %20 = vector.shape_cast %19 : vector<1x8x128xf32> to vector<8x128xf32>
    %21 = vector.shape_cast %18 : vector<8x128xf32> to vector<1x8x128xf32>
    tpu.vector_store %arg6[%c0_13, %c0_14, %c0_15], %21 {strides = array<i32>} : memref<1x8x128xf32, #tpu.memory_space<vmem>>, vector<1x8x128xf32>,
    return
  }
  func.func @transform_0(%arg0: i32, %arg1: i32) -> (i32, i32, i32) {
    %c0_i32 = arith.constant 0 : i32
    %c0_i32_0 = arith.constant 0 : i32
    return %arg0, %arg1, %c0_i32 : i32, i32, i32
  }
  func.func @transform_1(%arg0: i32, %arg1: i32) -> (i32, i32, i32) {
    %c0_i32 = arith.constant 0 : i32
    %c0_i32_0 = arith.constant 0 : i32
    %c0_i32_1 = arith.constant 0 : i32
    return %arg0, %c0_i32, %c0_i32_0 : i32, i32, i32
  }
  func.func @transform_2(%arg0: i32, %arg1: i32) -> (i32, i32) {
    %c0_i32 = arith.constant 0 : i32
    %c0_i32_0 = arith.constant 0 : i32
    %c0_i32_1 = arith.constant 0 : i32
    return %c0_i32, %c0_i32_0 : i32, i32
  }
  func.func @transform_3(%arg0: i32, %arg1: i32) -> (i32, i32) {
    %c0_i32 = arith.constant 0 : i32
    %c0_i32_0 = arith.constant 0 : i32
    %c0_i32_1 = arith.constant 0 : i32
    return %c0_i32, %c0_i32_0 : i32, i32
  }
  func.func @transform_4(%arg0: i32, %arg1: i32) -> (i32, i32, i32) {
    %c0_i32 = arith.constant 0 : i32
    %c0_i32_0 = arith.constant 0 : i32
    return %arg0, %arg1, %c0_i32 : i32, i32, i32
  }
}

</mosaic_0001>

<llo_original>
// kernel: tpu_custom_call.1
$region0: #{tpu_custom_call.1}
  #allocation0 [shape = 'u32[]', space=smem, size = 0x4, offset = 0x4, fixed_abs, tag = 'smem constant byte address 0x4 - core index']
  #allocation1 [shape = 'u32[144,128]{1,0:T(1,128)}', space=vmem, size = 0x12000, scoped, tag = 'internal scratch']
  %s0 = inlined_call_operand.hbm [shape: f32[2,8,8], index: 0, kind: input, shape index: {}]
  %s1 = inlined_call_operand.hbm [shape: f32[2,8,128], index: 1, kind: input, shape index: {}]
  %s2 = inlined_call_operand.hbm [shape: f32[128,128], index: 2, kind: input, shape index: {}]
  %s3 = inlined_call_operand.vmem [shape: f32[1,128], index: 3, kind: input, shape index: {}]
  %s4 = inlined_call_operand.hbm [shape: f32[2,8,128], index: 4, kind: output, shape index: {}]
  %s5 = sld [smem:[#allocation0]]
  $region61: #{tpu_custom_call.1} parent=0
    _
  %s7 = ssub.s32 1, %s5
  %s8 = scalar_select 0, %s7, %s5
  $region1: #{tpu_custom_call.1} parent=0
    #allocation2 [shape = 'u8[8192]{0}', space=vmem, size = 0x2000, scoped, tag = 'input window, operand 0']
    #allocation3 [shape = 's32[2]{0}', space=sflag, size = 0x8, scoped, tag = 'scoped memory for tpu_custom_call.1']
    #allocation4 [shape = 's32[2]{0}', space=sflag, size = 0x8, scoped, tag = 'scoped memory for tpu_custom_call.1']
    #allocation5 [shape = 'u8[8192]{0}', space=vmem, size = 0x2000, scoped, tag = 'input window, operand 1']
    #allocation6 [shape = 's32[2]{0}', space=sflag, size = 0x8, scoped, tag = 'scoped memory for tpu_custom_call.1']
    #allocation7 [shape = 'u8[65536]{0}', space=vmem, size = 0x10000, scoped, tag = 'input window, operand 2, single buffered']
    #allocation8 [shape = 'u8[8192]{0}', space=vmem, size = 0x2000, scoped, tag = 'output window, operand 0']
    %9 = vsyncpa [#allocation3], 0
    %s10 = scalar_lea.sflag [#allocation3], 1
    %11 = vsyncpa %s10, 0
    %12 = vsyncpa [#allocation6], 0
    %s13 = scalar_lea.sflag [#allocation6], 1
    %14 = vsyncpa %s13, 0
    %15 = vsyncpa [#allocation4], 0
    %s16 = scalar_lea.sflag [#allocation4], 1
    %17 = vsyncpa %s16, 0
    loop: start=0, step=1, limit=4
    $region2: #{tpu_custom_call.1} parent=1 // loop_pre_header
      _
    $region3: #{tpu_custom_call.1} parent=1 // loop_header
      %s19 = sphi 0, %s23
      %p20 = scmp.ge.s32.totalorder %s19, 4
      %s26 = sphi 0, %s38
      %s27 = sphi 0, %s34
      %s28 = sphi 0, %s26
      %s29 = sphi 0, %s27
      %s30 = sphi 0, %s28
      %s31 = sphi 0, %s29
      %s43 = sphi 0, %s45
      %s46 = sphi 0, %s43
      %s47 = sphi 0, %s46
      %s63 = sphi 0, %s47
      %s69 = sphi 0, %s71
      %s72 = sphi 0, %s69
      %s73 = sphi 0, %s72
      %s89 = sphi 0, %s73
      %s93 = sphi 0, %s93
      %s95 = sphi 0, %s93
      %s96 = sphi 0, %s95
      %s110 = sphi 0, %s96
      %s114 = sphi 0, %s114
      %s116 = sphi 0, %s114
      %s117 = sphi 0, %s116
      %s131 = sphi 0, %s117
      %s139 = sphi 0, %s141
      %s142 = sphi 0, %s139
      %s143 = sphi 0, %s142
      %s159 = sphi 0, %s143
    $region4: #{tpu_custom_call.1} parent=1 // loop_header_branch
      %22 = sbr.rel (%p20) target = $region8
    $region5: #{tpu_custom_call.1} parent=1 // loop_body
      %s24 = ssub.s32 %s19, 1
      %s25 = ssub.s32 %s19, 2
      %s32 = sadd.s32 1, %s27
      %p33 = scmp.ge.s32.totalorder %s32, 1
      %s34 = scalar_select %p33, 0, %s32
      %s35 = sadd.s32 1, %s26
      %s36 = scalar_select %p33, %s35, %s26
      %p37 = scmp.ge.s32.totalorder %s36, 2
      %s38 = scalar_select %p37, 0, %s36
      %s39 = ssub.s32 %s26, %s38
      %s40 = ssub.s32 %s27, %s34
      %s41 = sor.u32 %s39, %s40
      %p42 = scmp.eq.s32.totalorder %s41, 0
      %s44 = sadd.s32 %s43, 1
      %s45 = scalar_select %p42, %s43, %s44
      %p48 = pneg %p42
      %p49 = scmp.eq.s32.totalorder %s19, 1
      %p50 = por %p48, %p49
      %p51 = scmp.ne.s32.totalorder %s43, %s46
      %p52 = scmp.eq.s32.totalorder %s19, 0
      %p53 = por %p51, %p52
      %p54 = scmp.ne.s32.totalorder %s43, %s46
      %p55 = scmp.eq.s32.totalorder %s24, 1
      %p56 = por %p54, %p55
      %p57 = scmp.ne.s32.totalorder %s46, %s47
      %p58 = scmp.eq.s32.totalorder %s24, 0
      %p59 = por %p57, %p58
      %p60 = scmp.ne.s32.totalorder %s46, %s47
      %p61 = scmp.eq.s32.totalorder %s25, 1
      %p62 = por %p60, %p61
      %p64 = scmp.ne.s32.totalorder %s47, %s63
      %p65 = scmp.eq.s32.totalorder %s25, 0
      %p66 = por %p64, %p65
      %s67 = ssub.s32 %s26, %s38
      %p68 = scmp.eq.s32.totalorder %s67, 0
      %s70 = sadd.s32 %s69, 1
      %s71 = scalar_select %p68, %s69, %s70
      %p74 = pneg %p68
      %p75 = scmp.eq.s32.totalorder %s19, 1
      %p76 = por %p74, %p75
      %p77 = scmp.ne.s32.totalorder %s69, %s72
      %p78 = scmp.eq.s32.totalorder %s19, 0
      %p79 = por %p77, %p78
      %p80 = scmp.ne.s32.totalorder %s69, %s72
      %p81 = scmp.eq.s32.totalorder %s24, 1
      %p82 = por %p80, %p81
      %p83 = scmp.ne.s32.totalorder %s72, %s73
      %p84 = scmp.eq.s32.totalorder %s24, 0
      %p85 = por %p83, %p84
      %p86 = scmp.ne.s32.totalorder %s72, %s73
      %p87 = scmp.eq.s32.totalorder %s25, 1
      %p88 = por %p86, %p87
      %p90 = scmp.ne.s32.totalorder %s73, %s89
      %p91 = scmp.eq.s32.totalorder %s25, 0
      %p92 = por %p90, %p91
      %s94 = sadd.s32 %s93, 1
      %p97 = scmp.eq.s32.totalorder %s19, 1
      %p98 = scmp.ne.s32.totalorder %s93, %s95
      %p99 = scmp.eq.s32.totalorder %s19, 0
      %p100 = por %p98, %p99
      %p101 = scmp.ne.s32.totalorder %s93, %s95
      %p102 = scmp.eq.s32.totalorder %s24, 1
      %p103 = por %p101, %p102
      %p104 = scmp.ne.s32.totalorder %s95, %s96
      %p105 = scmp.eq.s32.totalorder %s24, 0
      %p106 = por %p104, %p105
      %p107 = scmp.ne.s32.totalorder %s95, %s96
      %p108 = scmp.eq.s32.totalorder %s25, 1
      %p109 = por %p107, %p108
      %p111 = scmp.ne.s32.totalorder %s96, %s110
      %p112 = scmp.eq.s32.totalorder %s25, 0
      %p113 = por %p111, %p112
      %s115 = sadd.s32 %s114, 1
      %p118 = scmp.eq.s32.totalorder %s19, 1
      %p119 = scmp.ne.s32.totalorder %s114, %s116
      %p120 = scmp.eq.s32.totalorder %s19, 0
      %p121 = por %p119, %p120
      %p122 = scmp.ne.s32.totalorder %s114, %s116
      %p123 = scmp.eq.s32.totalorder %s24, 1
      %p124 = por %p122, %p123
      %p125 = scmp.ne.s32.totalorder %s116, %s117
      %p126 = scmp.eq.s32.totalorder %s24, 0
      %p127 = por %p125, %p126
      %p128 = scmp.ne.s32.totalorder %s116, %s117
      %p129 = scmp.eq.s32.totalorder %s25, 1
      %p130 = por %p128, %p129
      %p132 = scmp.ne.s32.totalorder %s117, %s131
      %p133 = scmp.eq.s32.totalorder %s25, 0
      %p134 = por %p132, %p133
      %s135 = ssub.s32 %s26, %s38
      %s136 = ssub.s32 %s27, %s34
      %s137 = sor.u32 %s135, %s136
      %p138 = scmp.eq.s32.totalorder %s137, 0
      %s140 = sadd.s32 %s139, 1
      %s141 = scalar_select %p138, %s139, %s140
      %p144 = pneg %p138
      %p145 = scmp.eq.s32.totalorder %s19, 1
      %p146 = por %p144, %p145
      %p147 = scmp.ne.s32.totalorder %s139, %s142
      %p148 = scmp.eq.s32.totalorder %s19, 0
      %p149 = por %p147, %p148
      %p150 = scmp.ne.s32.totalorder %s139, %s142
      %p151 = scmp.eq.s32.totalorder %s24, 1
      %p152 = por %p150, %p151
      %p153 = scmp.ne.s32.totalorder %s142, %s143
      %p154 = scmp.eq.s32.totalorder %s24, 0
      %p155 = por %p153, %p154
      %p156 = scmp.ne.s32.totalorder %s142, %s143
      %p157 = scmp.eq.s32.totalorder %s25, 1
      %p158 = por %p156, %p157
      %p160 = scmp.ne.s32.totalorder %s143, %s159
      %p161 = scmp.eq.s32.totalorder %s25, 0
      %p162 = por %p160, %p161
      %p163 = scmp.le.s32.totalorder 1, %s19
      %p164 = scmp.lt.s32.totalorder %s19, 3
      %p165 = pnand %p163, %p164
      %p166 = pneg %p165
      // Predicated region
      $region9: #{tpu_custom_call.1} parent=5 // pred_check
        _
      $region10: #{tpu_custom_call.1} parent=5 // pred_check_branch
        %168 = sbr.rel (%p165) target = $region12
      $region11: #{tpu_custom_call.1} parent=5 // pred_region
        %s169 = ssub.s32 %s19, 1
        // Predicated region
        $region13: #{tpu_custom_call.1} parent=11 // pred_check
          %p170 = pneg %p106
        $region14: #{tpu_custom_call.1} parent=11 // pred_check_branch
          %172 = sbr.rel (%p170) target = $region16
        $region15: #{tpu_custom_call.1} parent=11 // pred_region
          %s174 = ssub.s32 2048, 2048
          %175 = vsyncadd [#allocation6], %s174
          %s176 = sshll.u32 [#allocation7], 4
          %s177 = int_to_ptr.vmem [resolvable:$true] %s176
          %182 = dma.hbm_to_vmem [thread:$0]  %s2, 2048, %s177, [#allocation6], 128, 128, 8
        $region16: #{tpu_custom_call.1} parent=11 // pred_fallthru
          _
        // Predicated region
        $region17: #{tpu_custom_call.1} parent=11 // pred_check
          %p183 = pneg %p127
        $region18: #{tpu_custom_call.1} parent=11 // pred_check_branch
          %185 = sbr.rel (%p183) target = $region20
        $region19: #{tpu_custom_call.1} parent=11 // pred_region
          _
        $region20: #{tpu_custom_call.1} parent=11 // pred_fallthru
          _
      $region12: #{tpu_custom_call.1} parent=5 // pred_fallthru
        _
      %p186 = scmp.lt.s32.totalorder %s19, 2
      // Predicated region
      $region21: #{tpu_custom_call.1} parent=5 // pred_check
        %p187 = pneg %p186
      $region22: #{tpu_custom_call.1} parent=5 // pred_check_branch
        %189 = sbr.rel (%p187) target = $region24
      $region23: #{tpu_custom_call.1} parent=5 // pred_region
        // Predicated region
        $region25: #{tpu_custom_call.1} parent=23 // pred_check
          %p190 = pneg %p53
        $region26: #{tpu_custom_call.1} parent=23 // pred_check_branch
          %192 = sbr.rel (%p190) target = $region28
        $region27: #{tpu_custom_call.1} parent=23 // pred_region
          %s193 = sand.u32 %s43, 1
          %s194 = scalar_lea.sflag [#allocation3], %s193
          %s195 = sand.u32 %s43, 1
          %s196 = smul.addr %s195, 8
          %s197 = scalar_lea.vmem [#allocation2], %s196
          %s199 = ssub.s32 128, 128
          %200 = vsyncadd %s194, %s199
          %s201 = sadd.s32 %s27, %s26
          %s202 = smul.addr %s201, 128
          %s203 = scalar_lea.hbm %s0, %s202
          %s205 = sshll.u32 %s197, 4
          %s206 = int_to_ptr.vmem [resolvable:$true] %s205
          %208 = dma.hbm_to_vmem [thread:$0]  %s203, 128, %s206, %s194
        $region28: #{tpu_custom_call.1} parent=23 // pred_fallthru
          _
        // Predicated region
        $region29: #{tpu_custom_call.1} parent=23 // pred_check
          %p209 = pneg %p79
        $region30: #{tpu_custom_call.1} parent=23 // pred_check_branch
          %211 = sbr.rel (%p209) target = $region32
        $region31: #{tpu_custom_call.1} parent=23 // pred_region
          %s212 = sand.u32 %s19, 1
          %s213 = scalar_lea.sflag [#allocation6], %s212
          %s214 = sand.u32 %s69, 1
          %s215 = smul.addr %s214, 8
          %s216 = scalar_lea.vmem [#allocation5], %s215
          %s218 = ssub.s32 128, 128
          %219 = vsyncadd %s213, %s218
          %s220 = smul.addr %s26, 128
          %s221 = scalar_lea.hbm %s1, %s220
          %s223 = sshll.u32 %s216, 4
          %s224 = int_to_ptr.vmem [resolvable:$true] %s223
          %226 = dma.hbm_to_vmem [thread:$0]  %s221, 128, %s224, %s213
        $region32: #{tpu_custom_call.1} parent=23 // pred_fallthru
          _
      $region24: #{tpu_custom_call.1} parent=5 // pred_fallthru
        _
      %p227 = scmp.le.s32.totalorder 1, %s19
      %p228 = scmp.lt.s32.totalorder %s19, 3
      %p229 = pnand %p227, %p228
      %p230 = pneg %p229
      // Predicated region
      $region33: #{tpu_custom_call.1} parent=5 // pred_check
        _
      $region34: #{tpu_custom_call.1} parent=5 // pred_check_branch
        %232 = sbr.rel (%p229) target = $region36
      $region35: #{tpu_custom_call.1} parent=5 // pred_region
        %s233 = ssub.s32 %s19, 1
        %s234 = sand.u32 %s46, 1
        %s235 = scalar_lea.sflag [#allocation3], %s234
        %s236 = sand.u32 %s46, 1
        %s237 = smul.addr %s236, 8
        %s238 = scalar_lea.vmem [#allocation2], %s237
        // Predicated region
        $region37: #{tpu_custom_call.1} parent=35 // pred_check
          %p239 = pneg %p59
        $region38: #{tpu_custom_call.1} parent=35 // pred_check_branch
          %241 = sbr.rel (%p239) target = $region40
        $region39: #{tpu_custom_call.1} parent=35 // pred_region
          %242 = dma.done %s235, 128
        $region40: #{tpu_custom_call.1} parent=35 // pred_fallthru
          _
        %s243 = sand.u32 %s24, 1
        %s244 = scalar_lea.sflag [#allocation6], %s243
        %s245 = sand.u32 %s72, 1
        %s246 = smul.addr %s245, 8
        %s247 = scalar_lea.vmem [#allocation5], %s246
        // Predicated region
        $region41: #{tpu_custom_call.1} parent=35 // pred_check
          %p248 = pneg %p85
        $region42: #{tpu_custom_call.1} parent=35 // pred_check_branch
          %250 = sbr.rel (%p248) target = $region44
        $region43: #{tpu_custom_call.1} parent=35 // pred_region
          %251 = dma.done %s244, 128
        $region44: #{tpu_custom_call.1} parent=35 // pred_fallthru
          _
        // Predicated region
        $region45: #{tpu_custom_call.1} parent=35 // pred_check
          %p252 = pneg %p106
        $region46: #{tpu_custom_call.1} parent=35 // pred_check_branch
          %254 = sbr.rel (%p252) target = $region48
        $region47: #{tpu_custom_call.1} parent=35 // pred_region
          %255 = dma.done [#allocation6], 2048
        $region48: #{tpu_custom_call.1} parent=35 // pred_fallthru
          _
        %s256 = sand.u32 %s46, 1
        %s257 = scalar_lea.sflag [#allocation3], %s256
        %s258 = sand.u32 %s46, 1
        %s259 = smul.addr %s258, 8
        %s260 = scalar_lea.vmem [#allocation2], %s259
        %p261 = pneg %p59
        %p262 = pneg %p56
        %s263 = sand.u32 %s24, 1
        %s264 = scalar_lea.sflag [#allocation6], %s263
        %s265 = sand.u32 %s72, 1
        %s266 = smul.addr %s265, 8
        %s267 = scalar_lea.vmem [#allocation5], %s266
        %p268 = pneg %p85
        %p269 = pneg %p82
        %p270 = pneg %p106
        %p271 = pneg %p103
        %p272 = pneg %p127
        %p273 = pneg %p124
        %p274 = pneg %p155
        %p275 = pneg %p152
        %s276 = sand.u32 %s142, 1
        %s277 = scalar_lea.sflag [#allocation4], %s276
        %s278 = sand.u32 %s142, 1
        %s279 = smul.addr %s278, 8
        %s280 = scalar_lea.vmem [#allocation8], %s279
        %v281 = vld [vmem:[%s238] sm:$0xff]
        %v282 = vld [vmem:[%s247] sm:$0xff]
        %v283 = vld [vmem:[#allocation7] sm:$0xff]
        %v284 = vld [vmem:[#allocation7 + $0x8] sm:$0xff]
        %v285 = vld [vmem:[#allocation7 + $0x10] sm:$0xff]
        %v286 = vld [vmem:[#allocation7 + $0x18] sm:$0xff]
        %v287 = vld [vmem:[#allocation7 + $0x20] sm:$0xff]
        %v288 = vld [vmem:[#allocation7 + $0x28] sm:$0xff]
        %v289 = vld [vmem:[#allocation7 + $0x30] sm:$0xff]
        %v290 = vld [vmem:[#allocation7 + $0x38] sm:$0xff]
        %v291 = vld [vmem:[#allocation7 + $0x40] sm:$0xff]
        %v292 = vld [vmem:[#allocation7 + $0x48] sm:$0xff]
        %v293 = vld [vmem:[#allocation7 + $0x50] sm:$0xff]
        %v294 = vld [vmem:[#allocation7 + $0x58] sm:$0xff]
        %v295 = vld [vmem:[#allocation7 + $0x60] sm:$0xff]
        %v296 = vld [vmem:[#allocation7 + $0x68] sm:$0xff]
        %v297 = vld [vmem:[#allocation7 + $0x70] sm:$0xff]
        %v298 = vld [vmem:[#allocation7 + $0x78] sm:$0xff]
        %v299 = vld [vmem:[%s3] sm:$0x1]
        %vm300 = vcmask 64512
        %v301 = vsel %vm300, %v281, 0.0
        %302 = vadd.xlane.f32.xlu0 %v301
        %v303 = vpop.xlane.xlu0 %302
        %v304 = vadd.f32 %v303, 1.0
        %v305 = vrcp.pop %v304
        %v307 = vsel %vm300, %v281, 0
        %309 = vmatprep.subr.mxu0 0.0
        %310 = vmatpush1.msra.mxu0 0.0
        %311 = vmatprep.subr.mxu0 0.0
        %312 = vmatpush1.msra.mxu0 0.0
        %313 = vmatprep.subr.mxu0 0.0
        %314 = vmatpush1.msra.mxu0 0.0
        %315 = vmatprep.subr.mxu0 0.0
        %316 = vmatpush1.msra.mxu0 0.0
        %317 = vmatprep.subr.mxu0 0.0
        %318 = vmatpush1.msra.mxu0 0.0
        %319 = vmatprep.subr.mxu0 0.0
        %320 = vmatpush1.msra.mxu0 0.0
        %321 = vmatprep.subr.mxu0 0.0
        %322 = vmatpush1.msra.mxu0 0.0
        %323 = vmatprep.subr.mxu0 0.0
        %324 = vmatpush1.msra.mxu0 0.0
        %325 = vmatprep.subr.mxu0 0.0
        %326 = vmatpush1.msra.mxu0 0.0
        %327 = vmatprep.subr.mxu0 0.0
        %328 = vmatpush1.msra.mxu0 0.0
        %329 = vmatprep.subr.mxu0 0.0
        %330 = vmatpush1.msra.mxu0 0.0
        %331 = vmatprep.subr.mxu0 0.0
        %332 = vmatpush1.msra.mxu0 0.0
        %333 = vmatprep.subr.mxu0 0.0
        %334 = vmatpush1.msra.mxu0 0.0
        %335 = vmatprep.subr.mxu0 0.0
        %336 = vmatpush1.msra.mxu0 0.0
        %337 = vmatprep.subr.mxu0 0.0
        %338 = vmatpush1.msra.mxu0 0.0
        %339 = vmatprep.subr.mxu0 0.0
        %340 = vmatpush1.msra.mxu0 %v282
        %341 = vmatprep.subr.mxu0 0.0
        %342 = vmatpush2.msra.mxu0 0.0
        %343 = vmatprep.subr.mxu0 0.0
        %344 = vmatpush2.msra.mxu0 0.0
        %345 = vmatprep.subr.mxu0 0.0
        %346 = vmatpush2.msra.mxu0 0.0
        %347 = vmatprep.subr.mxu0 0.0
        %348 = vmatpush2.msra.mxu0 0.0
        %349 = vmatprep.subr.mxu0 0.0
        %350 = vmatpush2.msra.mxu0 0.0
        %351 = vmatprep.subr.mxu0 0.0
        %352 = vmatpush2.msra.mxu0 0.0
        %353 = vmatprep.subr.mxu0 0.0
        %354 = vmatpush2.msra.mxu0 0.0
        %355 = vmatprep.subr.mxu0 0.0
        %356 = vmatpush2.msra.mxu0 0.0
        %357 = vmatprep.subr.mxu0 0.0
        %358 = vmatpush2.msra.mxu0 0.0
        %359 = vmatprep.subr.mxu0 0.0
        %360 = vmatpush2.msra.mxu0 0.0
        %361 = vmatprep.subr.mxu0 0.0
        %362 = vmatpush2.msra.mxu0 0.0
        %363 = vmatprep.subr.mxu0 0.0
        %364 = vmatpush2.msra.mxu0 0.0
        %365 = vmatprep.subr.mxu0 0.0
        %366 = vmatpush2.msra.mxu0 0.0
        %367 = vmatprep.subr.mxu0 0.0
        %368 = vmatpush2.msra.mxu0 0.0
        %369 = vmatprep.subr.mxu0 0.0
        %370 = vmatpush2.msra.mxu0 0.0
        %371 = vmatprep.subr.mxu0 0.0
        %372 = vmatpush2.msra.mxu0 0.0
        %373 = vmatprep.mubr.f32.mxu0 0.0
        %374 = vmatmul.mubr.f32.gmra.mxu0 %v307
        %v375 = vpop.f32.mrf.mxu0
        %v376 = vadd.f32 0.0, %v375
        %v377 = vpop.f32.mrf.mxu0
        %378 = vdwg.mxu0
        %v380 = vlaneseq
        %v381 = vshrl.u32 %v380, 7
        %v382 = vsub.s32 0, %v381
        %v383 = vrot.slane %v299, %v382
        %385 = vmatprep.subr.mxu0 0.0
        %386 = vmatpush1.msra.mxu0 %v298
        %387 = vmatprep.subr.mxu0 0.0
        %388 = vmatpush1.msra.mxu0 %v297
        %389 = vmatprep.subr.mxu0 0.0
        %390 = vmatpush1.msra.mxu0 %v296
        %391 = vmatprep.subr.mxu0 0.0
        %392 = vmatpush1.msra.mxu0 %v295
        %393 = vmatprep.subr.mxu0 0.0
        %394 = vmatpush1.msra.mxu0 %v294
        %395 = vmatprep.subr.mxu0 0.0
        %396 = vmatpush1.msra.mxu0 %v293
        %397 = vmatprep.subr.mxu0 0.0
        %398 = vmatpush1.msra.mxu0 %v292
        %399 = vmatprep.subr.mxu0 0.0
        %400 = vmatpush1.msra.mxu0 %v291
        %401 = vmatprep.subr.mxu0 0.0
        %402 = vmatpush1.msra.mxu0 %v290
        %403 = vmatprep.subr.mxu0 0.0
        %404 = vmatpush1.msra.mxu0 %v289
        %405 = vmatprep.subr.mxu0 0.0
        %406 = vmatpush1.msra.mxu0 %v288
        %407 = vmatprep.subr.mxu0 0.0
        %408 = vmatpush1.msra.mxu0 %v287
        %409 = vmatprep.subr.mxu0 0.0
        %410 = vmatpush1.msra.mxu0 %v286
        %411 = vmatprep.subr.mxu0 0.0
        %412 = vmatpush1.msra.mxu0 %v285
        %413 = vmatprep.subr.mxu0 0.0
        %414 = vmatpush1.msra.mxu0 %v284
        %415 = vmatprep.subr.mxu0 0.0
        %416 = vmatpush1.msra.mxu0 %v283
        %417 = vmatprep.subr.mxu0 0.0
        %418 = vmatpush2.msra.mxu0 0.0
        %419 = vmatprep.subr.mxu0 0.0
        %420 = vmatpush2.msra.mxu0 0.0
        %421 = vmatprep.subr.mxu0 0.0
        %422 = vmatpush2.msra.mxu0 0.0
        %423 = vmatprep.subr.mxu0 0.0
        %424 = vmatpush2.msra.mxu0 0.0
        %425 = vmatprep.subr.mxu0 0.0
        %426 = vmatpush2.msra.mxu0 0.0
        %427 = vmatprep.subr.mxu0 0.0
        %428 = vmatpush2.msra.mxu0 0.0
        %429 = vmatprep.subr.mxu0 0.0
        %430 = vmatpush2.msra.mxu0 0.0
        %431 = vmatprep.subr.mxu0 0.0
        %432 = vmatpush2.msra.mxu0 0.0
        %433 = vmatprep.subr.mxu0 0.0
        %434 = vmatpush2.msra.mxu0 0.0
        %435 = vmatprep.subr.mxu0 0.0
        %436 = vmatpush2.msra.mxu0 0.0
        %437 = vmatprep.subr.mxu0 0.0
        %438 = vmatpush2.msra.mxu0 0.0
        %439 = vmatprep.subr.mxu0 0.0
        %440 = vmatpush2.msra.mxu0 0.0
        %441 = vmatprep.subr.mxu0 0.0
        %442 = vmatpush2.msra.mxu0 0.0
        %443 = vmatprep.subr.mxu0 0.0
        %444 = vmatpush2.msra.mxu0 0.0
        %445 = vmatprep.subr.mxu0 0.0
        %446 = vmatpush2.msra.mxu0 0.0
        %447 = vmatprep.subr.mxu0 0.0
        %448 = vmatpush2.msra.mxu0 0.0
        %449 = vmatprep.mubr.f32.mxu0 0.0
        %450 = vmatmul.mubr.f32.gmra.mxu0 %v376
        %v451 = vpop.f32.mrf.mxu0
        %v452 = vadd.f32 %v383, %v451
        %v453 = vpop.f32.mrf.mxu0
        %454 = vdwg.mxu0
        %v455 = vmul.f32 %v452, %v305
        %v456 = vmax.f32 %v455, 0.0
        %457 = vst [vmem:[%s280] sm:$0xff] %v456
        %s458 = sand.u32 %s142, 1
        %s459 = scalar_lea.sflag [#allocation4], %s458
        %s460 = sand.u32 %s142, 1
        %s461 = smul.addr %s460, 8
        %s462 = scalar_lea.vmem [#allocation8], %s461
        // Predicated region
        $region49: #{tpu_custom_call.1} parent=35 // pred_check
          %p463 = pneg %p152
        $region50: #{tpu_custom_call.1} parent=35 // pred_check_branch
          %465 = sbr.rel (%p463) target = $region52
        $region51: #{tpu_custom_call.1} parent=35 // pred_region
          %s467 = ssub.s32 128, 128
          %468 = vsyncadd %s459, %s467
          %s469 = sadd.s32 %s29, %s28
          %s470 = smul.addr %s469, 128
          %s471 = scalar_lea.hbm %s4, %s470
          %s473 = sshll.u32 %s462, 4
          %s474 = int_to_ptr.vmem [resolvable:$true] %s473
          %476 = dma.vmem_to_hbm [thread:$0]  %s474, 128, %s471, %s459
        $region52: #{tpu_custom_call.1} parent=35 // pred_fallthru
          _
      $region36: #{tpu_custom_call.1} parent=5 // pred_fallthru
        _
      %p477 = scmp.le.s32.totalorder 2, %s19
      // Predicated region
      $region53: #{tpu_custom_call.1} parent=5 // pred_check
        %p478 = pneg %p477
      $region54: #{tpu_custom_call.1} parent=5 // pred_check_branch
        %480 = sbr.rel (%p478) target = $region56
      $region55: #{tpu_custom_call.1} parent=5 // pred_region
        %s481 = ssub.s32 %s19, 2
        // Predicated region
        $region57: #{tpu_custom_call.1} parent=55 // pred_check
          %p482 = pneg %p158
        $region58: #{tpu_custom_call.1} parent=55 // pred_check_branch
          %484 = sbr.rel (%p482) target = $region60
        $region59: #{tpu_custom_call.1} parent=55 // pred_region
          %s485 = sand.u32 %s143, 1
          %s486 = scalar_lea.sflag [#allocation4], %s485
          %s487 = sand.u32 %s143, 1
          %s488 = smul.addr %s487, 8
          %s489 = scalar_lea.vmem [#allocation8], %s488
          %490 = dma.done %s486, 128
        $region60: #{tpu_custom_call.1} parent=55 // pred_fallthru
          _
      $region56: #{tpu_custom_call.1} parent=5 // pred_fallthru
        _
    $region6: #{tpu_custom_call.1} parent=1 // loop_footer
      %s23 = sadd.s32 1, %s19
    $region7: #{tpu_custom_call.1} parent=1 // loop_footer_branch
      %18 = sbr.rel target = $region3
    $region8: #{tpu_custom_call.1} parent=1 // loop_exit
      _
    %491 = vsyncpa [#allocation3], 1
    %s492 = scalar_lea.sflag [#allocation3], 1
    %493 = vsyncpa %s492, 1
    %494 = vsyncpa [#allocation6], 1
    %s495 = scalar_lea.sflag [#allocation6], 1
    %496 = vsyncpa %s495, 1
    %497 = vsyncpa [#allocation4], 1
    %s498 = scalar_lea.sflag [#allocation4], 1
    %499 = vsyncpa %s498, 1

</llo_original>
